<compile_context>
chip_gen: v7x
topology: tpu7x:2x2x1
jax: 0.10.0
libtpu: 0.0.40
codegen_flags: <defaults>
</compile_context>

<pallas_src>
import jax
import jax.numpy as jnp
from jax.experimental import pallas as pl
from jax.experimental.pallas import tpu as pltpu


def _round_up(x, m):
    return ((x + m - 1) // m) * m


def _make_lif_kernel(beta, vthresh, vreset):
    # Plain Python floats -> compile-time constants inside the kernel.
    beta = float(beta)
    vthresh = float(vthresh)
    vreset = float(vreset)

    def lif_kernel(v_ref, i_ref, s_ref, vmem_ref, spk_ref):
        v = v_ref[...].astype(jnp.float32)
        cur = i_ref[...].astype(jnp.float32)
        s = s_ref[...].astype(jnp.float32)
        # Vmem = beta*V + I + Vreset*S
        vmem_ref[...] = beta * v + cur + vreset * s
        # spk = (V - Vthresh > 0).float()  ==  (V > Vthresh).float()
        spk_ref[...] = (v > vthresh).astype(jnp.float32)

    return lif_kernel


def lif_forward(V, I, S, *, Vthresh, Vreset, beta=0.95):
    """Pallas LIF forward. V, I, S: same-shape arrays (e.g. NCHW).

    Returns (Vmem, spk) as float32 arrays with V's original shape.
    """
    orig_shape = V.shape
    total = V.size

    LANES = 128
    MAX_TM = 2048  # ~1 MiB f32 per buffer; 10 buffers ~10 MiB < 16 MiB scoped (v5e)

    # Rows needed to hold all elements lane-densely.
    M = pl.cdiv(total, LANES)
    # Row tile: multiple of 8 (sublane), capped at MAX_TM.
    TM = min(MAX_TM, _round_up(M, 8))
    # Pad rows so the grid divides evenly (no whole-array fallback block).
    M_pad = _round_up(M, TM)
    padded_total = M_pad * LANES
    pad = padded_total - total

    def to_slab(x):
        flat = x.reshape(-1)
        if pad:
            flat = jnp.pad(flat, (0, pad))
        return flat.reshape(M_pad, LANES)

    Vf = to_slab(V)
    If = to_slab(I)
    Sf = to_slab(S)

    kernel = _make_lif_kernel(beta, Vthresh, Vreset)

    spec = pl.BlockSpec((TM, LANES), lambda i: (i, 0))
    out_shape = jax.ShapeDtypeStruct((M_pad, LANES), jnp.float32)

    vmem, spk = pl.pallas_call(
        kernel,
        grid=(M_pad // TM,),
        in_specs=[spec, spec, spec],
        out_specs=(spec, spec),
        out_shape=(out_shape, out_shape),
        compiler_params=pltpu.CompilerParams(
            dimension_semantics=("parallel",),
        ),
    )(Vf, If, Sf)

    def from_slab(x):
        flat = x.reshape(-1)
        if pad:
            flat = flat[:total]
        return flat.reshape(orig_shape)

    return from_slab(vmem), from_slab(spk)


if __name__ == "__main__":
    key = jax.random.PRNGKey(0)
    k1, k2, k3 = jax.random.split(key, 3)

    # NCHW: batch=2, channels=4, spatial=16x16
    shape = (2, 4, 16, 16)
    V = jax.random.normal(k1, shape, dtype=jnp.float32)
    I = jax.random.normal(k2, shape, dtype=jnp.float32)
    S = (jax.random.uniform(k3, shape) > 0.5).astype(jnp.float32)

    beta, Vthresh, Vreset = 0.95, 1.0, -0.2

    Vmem, spk = lif_forward(V, I, S, Vthresh=Vthresh, Vreset=Vreset, beta=beta)
    jax.block_until_ready((Vmem, spk))

    # Reference check (plain JAX)
    Vmem_ref = beta * V + I + Vreset * S
    spk_ref = (V - Vthresh > 0).astype(jnp.float32)
    assert jnp.allclose(Vmem, Vmem_ref, atol=1e-6)
    assert jnp.array_equal(spk, spk_ref)

    print("KERNEL_OK")
</pallas_src>

<mosaic_0001>
module attributes {stable_mosaic.version = 11 : i64} {
  func.func @lif_kernel(%arg0: i32, %arg1: memref<16x128xf32, #tpu.memory_space<vmem>>, %arg2: memref<16x128xf32, #tpu.memory_space<vmem>>, %arg3: memref<16x128xf32, #tpu.memory_space<vmem>>, %arg4: memref<16x128xf32, #tpu.memory_space<vmem>>, %arg5: memref<16x128xf32, #tpu.memory_space<vmem>>) attributes {dimension_semantics = [#tpu.dimension_semantics<parallel>], iteration_bounds = array<i64: 1>, scalar_prefetch = 0 : i64, scratch_operands = 0 : i64, tpu.core_type = #tpu.core_type<tc>, window_params = [{transform_indices = @transform_0, window_bounds = array<i64: 16, 128>}, {transform_indices = @transform_1, window_bounds = array<i64: 16, 128>}, {transform_indices = @transform_2, window_bounds = array<i64: 16, 128>}, {transform_indices = @transform_3, window_bounds = array<i64: 16, 128>}, {transform_indices = @transform_4, window_bounds = array<i64: 16, 128>}]} {
    %c0 = arith.constant 0 : index
    %c0_0 = arith.constant 0 : index
    %0 = vector.load %arg1[%c0, %c0_0] : memref<16x128xf32, #tpu.memory_space<vmem>>, vector<16x128xf32>
    %c0_1 = arith.constant 0 : index
    %c0_2 = arith.constant 0 : index
    %1 = vector.load %arg2[%c0_1, %c0_2] : memref<16x128xf32, #tpu.memory_space<vmem>>, vector<16x128xf32>
    %c0_3 = arith.constant 0 : index
    %c0_4 = arith.constant 0 : index
    %2 = vector.load %arg3[%c0_3, %c0_4] : memref<16x128xf32, #tpu.memory_space<vmem>>, vector<16x128xf32>
    %cst = arith.constant 0.949999988 : f32
    %3 = vector.broadcast %cst : f32 to vector<16x128xf32>
    %4 = arith.mulf %3, %0 : vector<16x128xf32>
    %5 = arith.addf %4, %1 : vector<16x128xf32>
    %cst_5 = arith.constant -2.000000e-01 : f32
    %6 = vector.broadcast %cst_5 : f32 to vector<16x128xf32>
    %7 = arith.mulf %6, %2 : vector<16x128xf32>
    %8 = arith.addf %5, %7 : vector<16x128xf32>
    %c0_6 = arith.constant 0 : index
    %c0_7 = arith.constant 0 : index
    %9 = vector.load %arg4[%c0_6, %c0_7] : memref<16x128xf32, #tpu.memory_space<vmem>>, vector<16x128xf32>
    tpu.vector_store %arg4[%c0_6, %c0_7], %8 {strides = array<i32>} : memref<16x128xf32, #tpu.memory_space<vmem>>, vector<16x128xf32>,
    %cst_8 = arith.constant 1.000000e+00 : f32
    %10 = vector.broadcast %cst_8 : f32 to vector<16x128xf32>
    %11 = arith.cmpf ogt, %0, %10 : vector<16x128xf32>
    %12 = arith.extui %11 : vector<16x128xi1> to vector<16x128xi32>
    %13 = arith.sitofp %12 : vector<16x128xi32> to vector<16x128xf32>
    %c0_9 = arith.constant 0 : index
    %c0_10 = arith.constant 0 : index
    %14 = vector.load %arg5[%c0_9, %c0_10] : memref<16x128xf32, #tpu.memory_space<vmem>>, vector<16x128xf32>
    tpu.vector_store %arg5[%c0_9, %c0_10], %13 {strides = array<i32>} : memref<16x128xf32, #tpu.memory_space<vmem>>, vector<16x128xf32>,
    return
  }
  func.func @transform_0(%arg0: i32) -> (i32, i32) {
    %c0_i32 = arith.constant 0 : i32
    %c0_i32_0 = arith.constant 0 : i32
    return %arg0, %c0_i32 : i32, i32
  }
  func.func @transform_1(%arg0: i32) -> (i32, i32) {
    %c0_i32 = arith.constant 0 : i32
    %c0_i32_0 = arith.constant 0 : i32
    return %arg0, %c0_i32 : i32, i32
  }
  func.func @transform_2(%arg0: i32) -> (i32, i32) {
    %c0_i32 = arith.constant 0 : i32
    %c0_i32_0 = arith.constant 0 : i32
    return %arg0, %c0_i32 : i32, i32
  }
  func.func @transform_3(%arg0: i32) -> (i32, i32) {
    %c0_i32 = arith.constant 0 : i32
    %c0_i32_0 = arith.constant 0 : i32
    return %arg0, %c0_i32 : i32, i32
  }
  func.func @transform_4(%arg0: i32) -> (i32, i32) {
    %c0_i32 = arith.constant 0 : i32
    %c0_i32_0 = arith.constant 0 : i32
    return %arg0, %c0_i32 : i32, i32
  }
}

</mosaic_0001>

<llo_original>
// kernel: tpu_custom_call.1
$region0: #{tpu_custom_call.1}
  #allocation0 [shape = 'u32[]', space=smem, size = 0x4, offset = 0x4, fixed_abs, tag = 'smem constant byte address 0x4 - core index']
  #allocation1 [shape = 'u32[144,128]{1,0:T(1,128)}', space=vmem, size = 0x12000, scoped, tag = 'internal scratch']
  %s0 = inlined_call_operand.hbm [shape: f32[16,128], index: 0, kind: input, shape index: {}]
  %s1 = inlined_call_operand.hbm [shape: f32[16,128], index: 1, kind: input, shape index: {}]
  %s2 = inlined_call_operand.hbm [shape: f32[16,128], index: 2, kind: input, shape index: {}]
  %s3 = inlined_call_operand.hbm [shape: f32[16,128], index: 3, kind: output, shape index: {0}]
  %s4 = inlined_call_operand.hbm [shape: f32[16,128], index: 4, kind: output, shape index: {1}]
  %5 = xla_tuple %s3, %s4
  %s6 = sld [smem:[#allocation0]]
  $region42: #{tpu_custom_call.1} parent=0
    _
  %s8 = ssub.s32 1, %s6
  %s9 = scalar_select 0, %s8, %s6
  $region1: #{tpu_custom_call.1} parent=0
    #allocation2 [shape = 'u8[8192]{0}', space=vmem, size = 0x2000, scoped, tag = 'input window, operand 0, single buffered']
    #allocation3 [shape = 's32[1]{0}', space=sflag, size = 0x4, scoped, tag = 'scoped memory for tpu_custom_call.1']
    #allocation4 [shape = 's32[1]{0}', space=sflag, size = 0x4, scoped, tag = 'scoped memory for tpu_custom_call.1']
    #allocation5 [shape = 'u8[8192]{0}', space=vmem, size = 0x2000, scoped, tag = 'input window, operand 1, single buffered']
    #allocation6 [shape = 's32[1]{0}', space=sflag, size = 0x4, scoped, tag = 'scoped memory for tpu_custom_call.1']
    #allocation7 [shape = 'u8[8192]{0}', space=vmem, size = 0x2000, scoped, tag = 'input window, operand 2, single buffered']
    #allocation8 [shape = 'u8[8192]{0}', space=vmem, size = 0x2000, scoped, tag = 'output window, operand 0, single buffered']
    #allocation9 [shape = 'u8[8192]{0}', space=vmem, size = 0x2000, scoped, tag = 'output window, operand 1, single buffered']
    #allocation10 [shape = 's32[1]{0}', space=sflag, size = 0x4, scoped, tag = 'scoped memory for tpu_custom_call.1']
    %10 = vsyncpa [#allocation3], 0
    %11 = vsyncpa [#allocation6], 0
    %12 = vsyncpa [#allocation4], 0
    %13 = vsyncpa [#allocation10], 0
    // Predicated region
    $region2: #{tpu_custom_call.1} parent=1 // pred_check
      _
    $region3: #{tpu_custom_call.1} parent=1 // pred_check_branch
      %15 = sbr.rel (0) target = $region5
    $region4: #{tpu_custom_call.1} parent=1 // pred_region
      %s17 = ssub.s32 256, 256
      %18 = vsyncadd [#allocation3], %s17
      %s19 = sshll.u32 [#allocation2], 4
      %s20 = int_to_ptr.vmem [resolvable:$true] %s19
      %25 = dma.hbm_to_vmem [thread:$0]  %s0, 256, %s20, [#allocation3], 128, 128, 8
    $region5: #{tpu_custom_call.1} parent=1 // pred_fallthru
      _
    // Predicated region
    $region6: #{tpu_custom_call.1} parent=1 // pred_check
      _
    $region7: #{tpu_custom_call.1} parent=1 // pred_check_branch
      %27 = sbr.rel (0) target = $region9
    $region8: #{tpu_custom_call.1} parent=1 // pred_region
      %s29 = ssub.s32 256, 256
      %30 = vsyncadd [#allocation6], %s29
      %s31 = sshll.u32 [#allocation5], 4
      %s32 = int_to_ptr.vmem [resolvable:$true] %s31
      %37 = dma.hbm_to_vmem [thread:$0]  %s1, 256, %s32, [#allocation6], 128, 128, 8
    $region9: #{tpu_custom_call.1} parent=1 // pred_fallthru
      _
    // Predicated region
    $region10: #{tpu_custom_call.1} parent=1 // pred_check
      _
    $region11: #{tpu_custom_call.1} parent=1 // pred_check_branch
      %39 = sbr.rel (0) target = $region13
    $region12: #{tpu_custom_call.1} parent=1 // pred_region
      %s41 = ssub.s32 256, 256
      %42 = vsyncadd [#allocation6], %s41
      %s43 = sshll.u32 [#allocation7], 4
      %s44 = int_to_ptr.vmem [resolvable:$true] %s43
      %49 = dma.hbm_to_vmem [thread:$0]  %s2, 256, %s44, [#allocation6], 128, 128, 8
    $region13: #{tpu_custom_call.1} parent=1 // pred_fallthru
      _
    // Predicated region
    $region14: #{tpu_custom_call.1} parent=1 // pred_check
      _
    $region15: #{tpu_custom_call.1} parent=1 // pred_check_branch
      %51 = sbr.rel (0) target = $region17
    $region16: #{tpu_custom_call.1} parent=1 // pred_region
      %52 = dma.done [#allocation3], 256
    $region17: #{tpu_custom_call.1} parent=1 // pred_fallthru
      _
    // Predicated region
    $region18: #{tpu_custom_call.1} parent=1 // pred_check
      _
    $region19: #{tpu_custom_call.1} parent=1 // pred_check_branch
      %54 = sbr.rel (0) target = $region21
    $region20: #{tpu_custom_call.1} parent=1 // pred_region
      %55 = dma.done [#allocation6], 256
    $region21: #{tpu_custom_call.1} parent=1 // pred_fallthru
      _
    // Predicated region
    $region22: #{tpu_custom_call.1} parent=1 // pred_check
      _
    $region23: #{tpu_custom_call.1} parent=1 // pred_check_branch
      %57 = sbr.rel (0) target = $region25
    $region24: #{tpu_custom_call.1} parent=1 // pred_region
      %58 = dma.done [#allocation6], 256
    $region25: #{tpu_custom_call.1} parent=1 // pred_fallthru
      _
    %v59 = vld [vmem:[#allocation2] sm:$0xff]
    %v60 = vld [vmem:[#allocation2 + $0x8] sm:$0xff]
    %v61 = vld [vmem:[#allocation5] sm:$0xff]
    %v62 = vld [vmem:[#allocation5 + $0x8] sm:$0xff]
    %v63 = vld [vmem:[#allocation7] sm:$0xff]
    %v64 = vld [vmem:[#allocation7 + $0x8] sm:$0xff]
    %v65 = vmul.f32 %v59, 0.95
    %v66 = vmul.f32 %v60, 0.95
    %v67 = vadd.f32 %v65, %v61
    %v68 = vadd.f32 %v66, %v62
    %v69 = vmul.f32 %v63, -0.2
    %v70 = vmul.f32 %v64, -0.2
    %v71 = vadd.f32 %v67, %v69
    %v72 = vadd.f32 %v68, %v70
    %73 = vst [vmem:[#allocation8] sm:$0xff] %v71
    %74 = vst [vmem:[#allocation8 + $0x8] sm:$0xff] %v72
    %vm75 = vcmp.gt.f32.partialorder %v59, 1.0
    %vm76 = vcmp.gt.f32.partialorder %v60, 1.0
    %v77 = vsel %vm75, 1, 0
    %v78 = vsel %vm76, 1, 0
    %v79 = vcvt.s32.f32 %v77
    %v80 = vcvt.s32.f32 %v78
    %81 = vst [vmem:[#allocation9] sm:$0xff] %v79
    %82 = vst [vmem:[#allocation9 + $0x8] sm:$0xff] %v80
    // Predicated region
    $region26: #{tpu_custom_call.1} parent=1 // pred_check
      _
    $region27: #{tpu_custom_call.1} parent=1 // pred_check_branch
      %84 = sbr.rel (0) target = $region29
    $region28: #{tpu_custom_call.1} parent=1 // pred_region
      %s86 = ssub.s32 256, 256
      %87 = vsyncadd [#allocation4], %s86
      %s88 = sshll.u32 [#allocation8], 4
      %s89 = int_to_ptr.vmem [resolvable:$true] %s88
      %94 = dma.vmem_to_hbm [thread:$0]  %s89, 256, %s3, [#allocation4], 128, 128, 8
    $region29: #{tpu_custom_call.1} parent=1 // pred_fallthru
      _
    // Predicated region
    $region30: #{tpu_custom_call.1} parent=1 // pred_check
      _
    $region31: #{tpu_custom_call.1} parent=1 // pred_check_branch
      %96 = sbr.rel (0) target = $region33
    $region32: #{tpu_custom_call.1} parent=1 // pred_region
      %s98 = ssub.s32 256, 256
      %99 = vsyncadd [#allocation10], %s98
      %s100 = sshll.u32 [#allocation9], 4
      %s101 = int_to_ptr.vmem [resolvable:$true] %s100
      %106 = dma.vmem_to_hbm [thread:$0]  %s101, 256, %s4, [#allocation10], 128, 128, 8
    $region33: #{tpu_custom_call.1} parent=1 // pred_fallthru
      _
    // Predicated region
    $region34: #{tpu_custom_call.1} parent=1 // pred_check
      _
    $region35: #{tpu_custom_call.1} parent=1 // pred_check_branch
      %108 = sbr.rel (0) target = $region37
    $region36: #{tpu_custom_call.1} parent=1 // pred_region
      %109 = dma.done [#allocation4], 256
    $region37: #{tpu_custom_call.1} parent=1 // pred_fallthru
      _
    // Predicated region
    $region38: #{tpu_custom_call.1} parent=1 // pred_check
      _
    $region39: #{tpu_custom_call.1} parent=1 // pred_check_branch
      %111 = sbr.rel (0) target = $region41
    $region40: #{tpu_custom_call.1} parent=1 // pred_region
      %112 = dma.done [#allocation10], 256
    $region41: #{tpu_custom_call.1} parent=1 // pred_fallthru
      _
    %113 = vsyncpa [#allocation3], 1
    %114 = vsyncpa [#allocation6], 1
    %115 = vsyncpa [#allocation4], 1
    %116 = vsyncpa [#allocation10], 1

</llo_original>
